<compile_context>
chip_gen: v7x
topology: tpu7x:2x2x1
jax: 0.10.0
libtpu: 0.0.40
codegen_flags: <defaults>
</compile_context>

<pallas_src>
import numpy as np
import jax
import jax.numpy as jnp
from jax.experimental import pallas as pl
from jax.experimental.pallas import tpu as pltpu


# --------------------------- host-side weight prep --------------------------- #

def _bicubic_filter(x, a=-0.5):
    """Keys cubic kernel (a = -0.5), same as PIL / torchvision bicubic."""
    x = np.abs(x)
    return np.where(
        x < 1.0,
        ((a + 2.0) * x - (a + 3.0)) * x * x + 1.0,
        np.where(x < 2.0, (((x - 5.0) * x + 8.0) * x - 4.0) * a, 0.0),
    )


def _resize_weight_matrix(in_size, out_size):
    """(out_size, in_size) antialiased bicubic interpolation weights
    (PIL / torchvision `antialias=True` algorithm)."""
    scale = in_size / out_size
    support = 2.0 * max(scale, 1.0)
    inv_scale = 1.0 / max(scale, 1.0)
    W = np.zeros((out_size, in_size), dtype=np.float32)
    for i in range(out_size):
        center = (i + 0.5) * scale
        xmin = max(int(center - support + 0.5), 0)
        xmax = min(int(center + support + 0.5), in_size)
        idx = np.arange(xmin, xmax, dtype=np.float64)
        w = _bicubic_filter((idx - center + 0.5) * inv_scale)
        w = w / w.sum()
        W[i, xmin:xmax] = w.astype(np.float32)
    return W


def _resized_hw(h, w, size):
    """torchvision Resize([size]): resize the SHORTER edge to `size`."""
    short, long = (w, h) if w <= h else (h, w)
    new_short, new_long = size, int(size * long / short)
    return (new_long, new_short) if w <= h else (new_short, new_long)


def _support(W):
    """[lo, hi) range of input columns with any nonzero weight."""
    nz = np.where(np.any(W != 0.0, axis=0))[0]
    return int(nz[0]), int(nz[-1]) + 1


def _ceil_to(x, m):
    return -(-x // m) * m


def _tile_bytes(rows, cols, itemsize, sublane):
    """Rough VMEM footprint of a 2-D slab after (sublane, 128) tiling."""
    return _ceil_to(max(rows, 1), sublane) * _ceil_to(max(cols, 1), 128) * itemsize


def _vmem_budget_bytes():
    """~3/4 of physical VMEM for this generation (96 MiB v5e/v6e, 48 MiB v7x)."""
    cap = 64 * 1024 * 1024  # conservative fallback
    try:
        info = pltpu.get_tpu_info()
        cap = int(getattr(info, "vmem_capacity_bytes", cap))
    except Exception:
        pass
    return (cap * 3) // 4


# ------------------------------ Pallas kernel ------------------------------ #

def _make_kernel(B, C, r0, Hw, c0, Ww, scale, bias):
    scale = [float(s) for s in scale]
    bias = [float(b) for b in bias]

    def kernel(x_ref, wh_ref, wwt_ref, o_ref):
        # x_ref:   (B, C, H_in, W_in) uint8
        # wh_ref:  (S, Hw)  bf16  vertical weights (crop + support trim folded in)
        # wwt_ref: (Ww, S)  bf16  horizontal weights, pre-transposed + trimmed
        # o_ref:   (B, C, S, S) float32
        wwt = wwt_ref[...]
        wh = wh_ref[...]
        for b in range(B):
            for c in range(C):
                # u8 -> f32 -> bf16 directly (0..255 exact in bf16); no i32 hop.
                xc = x_ref[b, c, r0:r0 + Hw, c0:c0 + Ww]
                xc = xc.astype(jnp.float32).astype(jnp.bfloat16)      # (Hw, Ww)
                # Stage 1: horizontal resize (+ crop) on the MXU.
                t = jnp.dot(xc, wwt,
                            preferred_element_type=jnp.float32)       # (Hw, S)
                # Stage 2: vertical resize (+ crop) on the MXU.
                y = jnp.dot(wh, t.astype(jnp.bfloat16),
                            preferred_element_type=jnp.float32)       # (S, S)
                # torchvision resize of a uint8 tensor rounds & clamps to u8.
                y = jnp.clip(jnp.round(y), 0.0, 255.0)
                # ConvertImageDtype (/255) + Normalize, folded into one FMA.
                o_ref[b, c] = y * scale[c] + bias[c]

    return kernel


def clip_image_transform(x_u8, image_size, mean, std):
    """x_u8: uint8 NCHW image batch. Returns float32 (N, C, S, S)."""
    N, C, H_in, W_in = x_u8.shape
    S = int(image_size)
    assert x_u8.dtype == jnp.uint8, "expects uint8 images (NCHW)"

    # Resize target (short edge -> S) + CenterCrop offsets (torchvision rules).
    new_h, new_w = _resized_hw(H_in, W_in, S)
    assert new_h >= S and new_w >= S, "pick shapes that don't require padding"
    crop_top = int(round((new_h - S) / 2.0))
    crop_left = int(round((new_w - S) / 2.0))

    wh_np = _resize_weight_matrix(H_in, new_h)[crop_top:crop_top + S]     # (S, H_in)
    ww_np = _resize_weight_matrix(W_in, new_w)[crop_left:crop_left + S]   # (S, W_in)

    # Trim to the crop's support window: after folding CenterCrop, whole bands
    # of input rows/cols have all-zero weight -> drop them from the weight
    # matrices and only read/multiply that window of the input.
    r0, r1 = _support(wh_np)
    c0, c1 = _support(ww_np)
    r0 = (r0 // 8) * 8                      # align row window to sublane tile
    Hw, Ww = r1 - r0, c1 - c0
    wh = jnp.asarray(wh_np[:, r0:r1], dtype=jnp.bfloat16)                 # (S, Hw)
    ww_t = jnp.asarray(np.ascontiguousarray(ww_np[:, c0:c1].T),
                       dtype=jnp.bfloat16)                                # (Ww, S)

    # Fold ConvertImageDtype(1/255) and Normalize into per-channel scale/bias
    # (compile-time constants baked into the kernel).
    mean_np = np.asarray(mean, dtype=np.float64)
    std_np = np.asarray(std, dtype=np.float64)
    scale = 1.0 / (255.0 * std_np)
    bias = -mean_np / std_np

    # ---- choose images-per-grid-step from the per-generation VMEM budget ----
    budget = _vmem_budget_bytes()
    per_img = (2 * C * _tile_bytes(H_in, W_in, 1, 32)      # u8 input, double-buffered
               + 2 * C * _tile_bytes(S, S, 4, 8))          # f32 output, double-buffered
    fixed = (2 * (_tile_bytes(S, Hw, 2, 16) + _tile_bytes(Ww, S, 2, 16))  # weights
             + 3 * _tile_bytes(Hw, Ww, 4, 8)               # per-channel working set
             + 3 * _tile_bytes(Hw, S, 4, 8)
             + 4 * _tile_bytes(S, S, 4, 8))
    divisors = [d for d in range(1, N + 1) if N % d == 0 and d <= 8]
    feasible = [d for d in divisors if fixed + d * per_img <= budget] or [1]
    pref = [d for d in feasible if N // d >= 2]   # keep >=2 grid steps for megacore
    B = max(pref) if pref else max(feasible)
    grid = (N // B,)
    # TODO(synk): for single huge images that exceed the VMEM budget (e.g. 4K
    # frames on v7x's 64 MiB VMEM), add a second "arbitrary" grid axis that
    # row-tiles H_in into a persistent (C, Hw, S) stage-1 scratch and runs
    # stage 2 + store under pl.when(last row block); not needed for CLIP-sized
    # inputs.

    flops = 2 * N * C * (Hw * Ww * S + Hw * S * S)
    bytes_accessed = (N * C * H_in * W_in            # uint8 input
                      + N * C * S * S * 4            # f32 output
                      + (wh.size + ww_t.size) * 2)   # bf16 weights

    kernel = _make_kernel(B, C, r0, Hw, c0, Ww, scale, bias)

    out = pl.pallas_call(
        kernel,
        out_shape=jax.ShapeDtypeStruct((N, C, S, S), jnp.float32),
        grid=grid,
        in_specs=[
            pl.BlockSpec((B, C, H_in, W_in), lambda n: (n, 0, 0, 0)),
            pl.BlockSpec((S, Hw), lambda n: (0, 0)),
            pl.BlockSpec((Ww, S), lambda n: (0, 0)),
        ],
        out_specs=pl.BlockSpec((B, C, S, S), lambda n: (n, 0, 0, 0)),
        compiler_params=pltpu.CompilerParams(
            dimension_semantics=("parallel",),
            vmem_limit_bytes=int(budget)),
        cost_estimate=pl.CostEstimate(
            flops=flops, transcendentals=0, bytes_accessed=bytes_accessed),
    )(x_u8, wh, ww_t)
    return out


# ---------------------------------- main ----------------------------------- #

if __name__ == "__main__":
    key = jax.random.PRNGKey(0)
    N, C, H_in, W_in = 2, 3, 32, 24
    image_size = 16
    mean = (0.48145466, 0.4578275, 0.40821073)   # CLIP normalization constants
    std = (0.26862954, 0.26130258, 0.27577711)

    x = jax.random.randint(key, (N, C, H_in, W_in), 0, 256, dtype=jnp.int32)
    x = x.astype(jnp.uint8)

    y = clip_image_transform(x, image_size, mean, std)
    jax.block_until_ready(y)

    assert y.shape == (N, C, image_size, image_size)
    assert y.dtype == jnp.float32
    assert bool(jnp.all(jnp.isfinite(y)))
    # clamped-to-[0,255] pixels normalized by CLIP mean/std stay well inside ±3
    assert float(jnp.max(jnp.abs(y))) < 3.0
    print("KERNEL_OK")
</pallas_src>

<mosaic_0001>
module attributes {stable_mosaic.version = 11 : i64} {
  func.func @kernel(%arg0: i32, %arg1: memref<1x3x32x24xi8, #tpu.memory_space<vmem>>, %arg2: memref<16x30xbf16, #tpu.memory_space<vmem>>, %arg3: memref<24x16xbf16, #tpu.memory_space<vmem>>, %arg4: memref<1x3x16x16xf32, #tpu.memory_space<vmem>>) attributes {dimension_semantics = [#tpu.dimension_semantics<parallel>], iteration_bounds = array<i64: 2>, scalar_prefetch = 0 : i64, scratch_operands = 0 : i64, tpu.core_type = #tpu.core_type<tc>, window_params = [{transform_indices = @transform_0, window_bounds = array<i64: 1, 3, 32, 24>}, {pipeline_mode = #tpu.pipeline_mode<synchronous>, transform_indices = @transform_1, window_bounds = array<i64: 16, 30>}, {pipeline_mode = #tpu.pipeline_mode<synchronous>, transform_indices = @transform_2, window_bounds = array<i64: 24, 16>}, {transform_indices = @transform_3, window_bounds = array<i64: 1, 3, 16, 16>}]} {
    %c0 = arith.constant 0 : index
    %c0_0 = arith.constant 0 : index
    %0 = vector.load %arg3[%c0, %c0_0] : memref<24x16xbf16, #tpu.memory_space<vmem>>, vector<24x16xbf16>
    %c0_1 = arith.constant 0 : index
    %c0_2 = arith.constant 0 : index
    %1 = vector.load %arg2[%c0_1, %c0_2] : memref<16x30xbf16, #tpu.memory_space<vmem>>, vector<16x30xbf16>
    %c0_3 = arith.constant 0 : index
    %c0_4 = arith.constant 0 : index
    %c0_5 = arith.constant 0 : index
    %c0_6 = arith.constant 0 : index
    %2 = vector.load %arg1[%c0_3, %c0_4, %c0_5, %c0_6] : memref<1x3x32x24xi8, #tpu.memory_space<vmem>>, vector<1x1x30x24xi8>
    %3 = vector.shape_cast %2 : vector<1x1x30x24xi8> to vector<30x24xi8>
    %4 = arith.uitofp %3 : vector<30x24xi8> to vector<30x24xf32>
    %5 = arith.truncf %4 : vector<30x24xf32> to vector<30x24xbf16>
    %cst = arith.constant dense<0.000000e+00> : vector<30x16xf32>
    %6 = tpu.matmul %5, %0, %cst {dimension_numbers = #tpu.dot_dimension_numbers<[1], [0], [0], [1], [0, 0, 1, 1], [], []>} : vector<30x24xbf16>, vector<24x16xbf16>, vector<30x16xf32> -> vector<30x16xf32>
    %7 = arith.truncf %6 : vector<30x16xf32> to vector<30x16xbf16>
    %cst_7 = arith.constant dense<0.000000e+00> : vector<16x16xf32>
    %8 = tpu.matmul %1, %7, %cst_7 {dimension_numbers = #tpu.dot_dimension_numbers<[1], [0], [0], [1], [0, 0, 1, 1], [], []>} : vector<16x30xbf16>, vector<30x16xbf16>, vector<16x16xf32> -> vector<16x16xf32>
    %9 = math.roundeven %8 : vector<16x16xf32>
    %cst_8 = arith.constant 0.000000e+00 : f32
    %cst_9 = arith.constant 2.550000e+02 : f32
    %10 = vector.broadcast %cst_8 : f32 to vector<16x16xf32>
    %11 = arith.maximumf %10, %9 : vector<16x16xf32>
    %12 = vector.broadcast %cst_9 : f32 to vector<16x16xf32>
    %13 = arith.minimumf %12, %11 : vector<16x16xf32>
    %cst_10 = arith.constant 0.0145984264 : f32
    %14 = vector.broadcast %cst_10 : f32 to vector<16x16xf32>
    %15 = arith.mulf %13, %14 : vector<16x16xf32>
    %cst_11 = arith.constant -1.79226255 : f32
    %16 = vector.broadcast %cst_11 : f32 to vector<16x16xf32>
    %17 = arith.addf %15, %16 : vector<16x16xf32>
    %c0_12 = arith.constant 0 : index
    %c0_13 = arith.constant 0 : index
    %c0_14 = arith.constant 0 : index
    %c0_15 = arith.constant 0 : index
    %18 = vector.load %arg4[%c0_12, %c0_13, %c0_14, %c0_15] : memref<1x3x16x16xf32, #tpu.memory_space<vmem>>, vector<1x1x16x16xf32>
    %19 = vector.shape_cast %18 : vector<1x1x16x16xf32> to vector<16x16xf32>
    %20 = vector.shape_cast %17 : vector<16x16xf32> to vector<1x1x16x16xf32>
    tpu.vector_store %arg4[%c0_12, %c0_13, %c0_14, %c0_15], %20 {strides = array<i32>} : memref<1x3x16x16xf32, #tpu.memory_space<vmem>>, vector<1x1x16x16xf32>,
    %c0_16 = arith.constant 0 : index
    %c1 = arith.constant 1 : index
    %c0_17 = arith.constant 0 : index
    %c0_18 = arith.constant 0 : index
    %21 = vector.load %arg1[%c0_16, %c1, %c0_17, %c0_18] : memref<1x3x32x24xi8, #tpu.memory_space<vmem>>, vector<1x1x30x24xi8>
    %22 = vector.shape_cast %21 : vector<1x1x30x24xi8> to vector<30x24xi8>
    %23 = arith.uitofp %22 : vector<30x24xi8> to vector<30x24xf32>
    %24 = arith.truncf %23 : vector<30x24xf32> to vector<30x24xbf16>
    %cst_19 = arith.constant dense<0.000000e+00> : vector<30x16xf32>
    %25 = tpu.matmul %24, %0, %cst_19 {dimension_numbers = #tpu.dot_dimension_numbers<[1], [0], [0], [1], [0, 0, 1, 1], [], []>} : vector<30x24xbf16>, vector<24x16xbf16>, vector<30x16xf32> -> vector<30x16xf32>
    %26 = arith.truncf %25 : vector<30x16xf32> to vector<30x16xbf16>
    %cst_20 = arith.constant dense<0.000000e+00> : vector<16x16xf32>
    %27 = tpu.matmul %1, %26, %cst_20 {dimension_numbers = #tpu.dot_dimension_numbers<[1], [0], [0], [1], [0, 0, 1, 1], [], []>} : vector<16x30xbf16>, vector<30x16xbf16>, vector<16x16xf32> -> vector<16x16xf32>
    %28 = math.roundeven %27 : vector<16x16xf32>
    %cst_21 = arith.constant 0.000000e+00 : f32
    %cst_22 = arith.constant 2.550000e+02 : f32
    %29 = vector.broadcast %cst_21 : f32 to vector<16x16xf32>
    %30 = arith.maximumf %29, %28 : vector<16x16xf32>
    %31 = vector.broadcast %cst_22 : f32 to vector<16x16xf32>
    %32 = arith.minimumf %31, %30 : vector<16x16xf32>
    %cst_23 = arith.constant 0.0150077688 : f32
    %33 = vector.broadcast %cst_23 : f32 to vector<16x16xf32>
    %34 = arith.mulf %32, %33 : vector<16x16xf32>
    %cst_24 = arith.constant -1.75209713 : f32
    %35 = vector.broadcast %cst_24 : f32 to vector<16x16xf32>
    %36 = arith.addf %34, %35 : vector<16x16xf32>
    %c0_25 = arith.constant 0 : index
    %c1_26 = arith.constant 1 : index
    %c0_27 = arith.constant 0 : index
    %c0_28 = arith.constant 0 : index
    %37 = vector.load %arg4[%c0_25, %c1_26, %c0_27, %c0_28] : memref<1x3x16x16xf32, #tpu.memory_space<vmem>>, vector<1x1x16x16xf32>
    %38 = vector.shape_cast %37 : vector<1x1x16x16xf32> to vector<16x16xf32>
    %39 = vector.shape_cast %36 : vector<16x16xf32> to vector<1x1x16x16xf32>
    tpu.vector_store %arg4[%c0_25, %c1_26, %c0_27, %c0_28], %39 {strides = array<i32>} : memref<1x3x16x16xf32, #tpu.memory_space<vmem>>, vector<1x1x16x16xf32>,
    %c0_29 = arith.constant 0 : index
    %c2 = arith.constant 2 : index
    %c0_30 = arith.constant 0 : index
    %c0_31 = arith.constant 0 : index
    %40 = vector.load %arg1[%c0_29, %c2, %c0_30, %c0_31] : memref<1x3x32x24xi8, #tpu.memory_space<vmem>>, vector<1x1x30x24xi8>
    %41 = vector.shape_cast %40 : vector<1x1x30x24xi8> to vector<30x24xi8>
    %42 = arith.uitofp %41 : vector<30x24xi8> to vector<30x24xf32>
    %43 = arith.truncf %42 : vector<30x24xf32> to vector<30x24xbf16>
    %cst_32 = arith.constant dense<0.000000e+00> : vector<30x16xf32>
    %44 = tpu.matmul %43, %0, %cst_32 {dimension_numbers = #tpu.dot_dimension_numbers<[1], [0], [0], [1], [0, 0, 1, 1], [], []>} : vector<30x24xbf16>, vector<24x16xbf16>, vector<30x16xf32> -> vector<30x16xf32>
    %45 = arith.truncf %44 : vector<30x16xf32> to vector<30x16xbf16>
    %cst_33 = arith.constant dense<0.000000e+00> : vector<16x16xf32>
    %46 = tpu.matmul %1, %45, %cst_33 {dimension_numbers = #tpu.dot_dimension_numbers<[1], [0], [0], [1], [0, 0, 1, 1], [], []>} : vector<16x30xbf16>, vector<30x16xbf16>, vector<16x16xf32> -> vector<16x16xf32>
    %47 = math.roundeven %46 : vector<16x16xf32>
    %cst_34 = arith.constant 0.000000e+00 : f32
    %cst_35 = arith.constant 2.550000e+02 : f32
    %48 = vector.broadcast %cst_34 : f32 to vector<16x16xf32>
    %49 = arith.maximumf %48, %47 : vector<16x16xf32>
    %50 = vector.broadcast %cst_35 : f32 to vector<16x16xf32>
    %51 = arith.minimumf %50, %49 : vector<16x16xf32>
    %cst_36 = arith.constant 0.0142200654 : f32
    %52 = vector.broadcast %cst_36 : f32 to vector<16x16xf32>
    %53 = arith.mulf %51, %52 : vector<16x16xf32>
    %cst_37 = arith.constant -1.48021972 : f32
    %54 = vector.broadcast %cst_37 : f32 to vector<16x16xf32>
    %55 = arith.addf %53, %54 : vector<16x16xf32>
    %c0_38 = arith.constant 0 : index
    %c2_39 = arith.constant 2 : index
    %c0_40 = arith.constant 0 : index
    %c0_41 = arith.constant 0 : index
    %56 = vector.load %arg4[%c0_38, %c2_39, %c0_40, %c0_41] : memref<1x3x16x16xf32, #tpu.memory_space<vmem>>, vector<1x1x16x16xf32>
    %57 = vector.shape_cast %56 : vector<1x1x16x16xf32> to vector<16x16xf32>
    %58 = vector.shape_cast %55 : vector<16x16xf32> to vector<1x1x16x16xf32>
    tpu.vector_store %arg4[%c0_38, %c2_39, %c0_40, %c0_41], %58 {strides = array<i32>} : memref<1x3x16x16xf32, #tpu.memory_space<vmem>>, vector<1x1x16x16xf32>,
    return
  }
  func.func @transform_0(%arg0: i32) -> (i32, i32, i32, i32) {
    %c0_i32 = arith.constant 0 : i32
    %c0_i32_0 = arith.constant 0 : i32
    %c0_i32_1 = arith.constant 0 : i32
    %c0_i32_2 = arith.constant 0 : i32
    return %arg0, %c0_i32, %c0_i32_0, %c0_i32_1 : i32, i32, i32, i32
  }
  func.func @transform_1(%arg0: i32) -> (i32, i32) {
    %c0_i32 = arith.constant 0 : i32
    %c0_i32_0 = arith.constant 0 : i32
    %c0_i32_1 = arith.constant 0 : i32
    return %c0_i32, %c0_i32_0 : i32, i32
  }
  func.func @transform_2(%arg0: i32) -> (i32, i32) {
    %c0_i32 = arith.constant 0 : i32
    %c0_i32_0 = arith.constant 0 : i32
    %c0_i32_1 = arith.constant 0 : i32
    return %c0_i32, %c0_i32_0 : i32, i32
  }
  func.func @transform_3(%arg0: i32) -> (i32, i32, i32, i32) {
    %c0_i32 = arith.constant 0 : i32
    %c0_i32_0 = arith.constant 0 : i32
    %c0_i32_1 = arith.constant 0 : i32
    %c0_i32_2 = arith.constant 0 : i32
    return %arg0, %c0_i32, %c0_i32_0, %c0_i32_1 : i32, i32, i32, i32
  }
}

</mosaic_0001>

<llo_original>
// kernel: tpu_custom_call.1
$region0: #{tpu_custom_call.1}
  #allocation0 [shape = 'u32[]', space=smem, size = 0x4, offset = 0x4, fixed_abs, tag = 'smem constant byte address 0x4 - core index']
  #allocation1 [shape = 'u32[144,128]{1,0:T(1,128)}', space=vmem, size = 0x12000, scoped, tag = 'internal scratch']
  %s0 = inlined_call_operand.vmem [shape: u8[2,3,32,24], index: 0, kind: input, shape index: {}]
  %s1 = inlined_call_operand.vmem [shape: bf16[16,30], index: 1, kind: input, shape index: {}]
  %s2 = inlined_call_operand.vmem [shape: bf16[24,16], index: 2, kind: input, shape index: {}]
  %s3 = inlined_call_operand.hbm [shape: f32[2,3,16,16], index: 3, kind: output, shape index: {}]
  %s4 = sld [smem:[#allocation0]]
  $region45: #{tpu_custom_call.1} parent=0
    _
  %s6 = ssub.s32 1, %s4
  %s7 = scalar_select 0, %s6, %s4
  $region1: #{tpu_custom_call.1} parent=0
    #allocation2 [shape = 'u8[49152]{0}', space=vmem, size = 0xc000, scoped, tag = 'output window, operand 0']
    #allocation3 [shape = 's32[2]{0}', space=sflag, size = 0x8, scoped, tag = 'scoped memory for tpu_custom_call.1']
    %8 = vsyncpa [#allocation3], 0
    %s9 = scalar_lea.sflag [#allocation3], 1
    %10 = vsyncpa %s9, 0
    loop: start=0, step=1, limit=4
    $region2: #{tpu_custom_call.1} parent=1 // loop_pre_header
      _
    $region3: #{tpu_custom_call.1} parent=1 // loop_header
      %s12 = sphi 0, %s16
      %p13 = scmp.ge.s32.totalorder %s12, 4
      %s22 = sphi 0, %s24
      %s25 = sphi 0, %s22
      %s26 = sphi 0, %s25
      %s42 = sphi 0, %s26
      %s46 = sphi 0, %s46
      %s48 = sphi 0, %s46
      %s49 = sphi 0, %s48
      %s63 = sphi 0, %s49
      %s67 = sphi 0, %s67
      %s69 = sphi 0, %s67
      %s70 = sphi 0, %s69
      %s84 = sphi 0, %s70
      %s90 = sphi 0, %s92
      %s93 = sphi 0, %s90
      %s94 = sphi 0, %s93
      %s110 = sphi 0, %s94
    $region4: #{tpu_custom_call.1} parent=1 // loop_header_branch
      %15 = sbr.rel (%p13) target = $region8
    $region5: #{tpu_custom_call.1} parent=1 // loop_body
      %s17 = ssub.s32 %s12, 1
      %s18 = ssub.s32 %s12, 2
      %s19 = sadd.s32 %s12, 1
      %s20 = ssub.s32 %s12, %s19
      %p21 = scmp.eq.s32.totalorder %s20, 0
      %s23 = sadd.s32 %s22, 1
      %s24 = scalar_select %p21, %s22, %s23
      %p27 = pneg %p21
      %p28 = scmp.eq.s32.totalorder %s12, 1
      %p29 = por %p27, %p28
      %p30 = scmp.ne.s32.totalorder %s22, %s25
      %p31 = scmp.eq.s32.totalorder %s12, 0
      %p32 = por %p30, %p31
      %p33 = scmp.ne.s32.totalorder %s22, %s25
      %p34 = scmp.eq.s32.totalorder %s17, 1
      %p35 = por %p33, %p34
      %p36 = scmp.ne.s32.totalorder %s25, %s26
      %p37 = scmp.eq.s32.totalorder %s17, 0
      %p38 = por %p36, %p37
      %p39 = scmp.ne.s32.totalorder %s25, %s26
      %p40 = scmp.eq.s32.totalorder %s18, 1
      %p41 = por %p39, %p40
      %p43 = scmp.ne.s32.totalorder %s26, %s42
      %p44 = scmp.eq.s32.totalorder %s18, 0
      %p45 = por %p43, %p44
      %s47 = sadd.s32 %s46, 1
      %p50 = scmp.eq.s32.totalorder %s12, 1
      %p51 = scmp.ne.s32.totalorder %s46, %s48
      %p52 = scmp.eq.s32.totalorder %s12, 0
      %p53 = por %p51, %p52
      %p54 = scmp.ne.s32.totalorder %s46, %s48
      %p55 = scmp.eq.s32.totalorder %s17, 1
      %p56 = por %p54, %p55
      %p57 = scmp.ne.s32.totalorder %s48, %s49
      %p58 = scmp.eq.s32.totalorder %s17, 0
      %p59 = por %p57, %p58
      %p60 = scmp.ne.s32.totalorder %s48, %s49
      %p61 = scmp.eq.s32.totalorder %s18, 1
      %p62 = por %p60, %p61
      %p64 = scmp.ne.s32.totalorder %s49, %s63
      %p65 = scmp.eq.s32.totalorder %s18, 0
      %p66 = por %p64, %p65
      %s68 = sadd.s32 %s67, 1
      %p71 = scmp.eq.s32.totalorder %s12, 1
      %p72 = scmp.ne.s32.totalorder %s67, %s69
      %p73 = scmp.eq.s32.totalorder %s12, 0
      %p74 = por %p72, %p73
      %p75 = scmp.ne.s32.totalorder %s67, %s69
      %p76 = scmp.eq.s32.totalorder %s17, 1
      %p77 = por %p75, %p76
      %p78 = scmp.ne.s32.totalorder %s69, %s70
      %p79 = scmp.eq.s32.totalorder %s17, 0
      %p80 = por %p78, %p79
      %p81 = scmp.ne.s32.totalorder %s69, %s70
      %p82 = scmp.eq.s32.totalorder %s18, 1
      %p83 = por %p81, %p82
      %p85 = scmp.ne.s32.totalorder %s70, %s84
      %p86 = scmp.eq.s32.totalorder %s18, 0
      %p87 = por %p85, %p86
      %s88 = ssub.s32 %s12, %s19
      %p89 = scmp.eq.s32.totalorder %s88, 0
      %s91 = sadd.s32 %s90, 1
      %s92 = scalar_select %p89, %s90, %s91
      %p95 = pneg %p89
      %p96 = scmp.eq.s32.totalorder %s12, 1
      %p97 = por %p95, %p96
      %p98 = scmp.ne.s32.totalorder %s90, %s93
      %p99 = scmp.eq.s32.totalorder %s12, 0
      %p100 = por %p98, %p99
      %p101 = scmp.ne.s32.totalorder %s90, %s93
      %p102 = scmp.eq.s32.totalorder %s17, 1
      %p103 = por %p101, %p102
      %p104 = scmp.ne.s32.totalorder %s93, %s94
      %p105 = scmp.eq.s32.totalorder %s17, 0
      %p106 = por %p104, %p105
      %p107 = scmp.ne.s32.totalorder %s93, %s94
      %p108 = scmp.eq.s32.totalorder %s18, 1
      %p109 = por %p107, %p108
      %p111 = scmp.ne.s32.totalorder %s94, %s110
      %p112 = scmp.eq.s32.totalorder %s18, 0
      %p113 = por %p111, %p112
      %p114 = scmp.le.s32.totalorder 1, %s12
      %p115 = scmp.lt.s32.totalorder %s12, 3
      %p116 = pnand %p114, %p115
      %p117 = pneg %p116
      // Predicated region
      $region9: #{tpu_custom_call.1} parent=5 // pred_check
        _
      $region10: #{tpu_custom_call.1} parent=5 // pred_check_branch
        %119 = sbr.rel (%p116) target = $region12
      $region11: #{tpu_custom_call.1} parent=5 // pred_region
        %s120 = ssub.s32 %s12, 1
        // Predicated region
        $region13: #{tpu_custom_call.1} parent=11 // pred_check
          %p121 = pneg %p59
        $region14: #{tpu_custom_call.1} parent=11 // pred_check_branch
          %123 = sbr.rel (%p121) target = $region16
        $region15: #{tpu_custom_call.1} parent=11 // pred_region
          _
        $region16: #{tpu_custom_call.1} parent=11 // pred_fallthru
          _
        // Predicated region
        $region17: #{tpu_custom_call.1} parent=11 // pred_check
          %p124 = pneg %p80
        $region18: #{tpu_custom_call.1} parent=11 // pred_check_branch
          %126 = sbr.rel (%p124) target = $region20
        $region19: #{tpu_custom_call.1} parent=11 // pred_region
          _
        $region20: #{tpu_custom_call.1} parent=11 // pred_fallthru
          _
      $region12: #{tpu_custom_call.1} parent=5 // pred_fallthru
        _
      %p127 = scmp.lt.s32.totalorder %s12, 2
      // Predicated region
      $region21: #{tpu_custom_call.1} parent=5 // pred_check
        %p128 = pneg %p127
      $region22: #{tpu_custom_call.1} parent=5 // pred_check_branch
        %130 = sbr.rel (%p128) target = $region24
      $region23: #{tpu_custom_call.1} parent=5 // pred_region
        // Predicated region
        $region25: #{tpu_custom_call.1} parent=23 // pred_check
          %p131 = pneg %p32
        $region26: #{tpu_custom_call.1} parent=23 // pred_check_branch
          %133 = sbr.rel (%p131) target = $region28
        $region27: #{tpu_custom_call.1} parent=23 // pred_region
          %p134 = scmp.lt.s32.totalorder %s12, 1
          %s135 = scalar_select %p134, %s12, 1
          %s136 = smul.addr %s135, 3
          %s137 = smul.addr %s136, 8
          %s138 = scalar_lea.vmem %s0, %s137
        $region28: #{tpu_custom_call.1} parent=23 // pred_fallthru
          _
      $region24: #{tpu_custom_call.1} parent=5 // pred_fallthru
        _
      %p139 = scmp.le.s32.totalorder 1, %s12
      %p140 = scmp.lt.s32.totalorder %s12, 3
      %p141 = pnand %p139, %p140
      %p142 = pneg %p141
      // Predicated region
      $region29: #{tpu_custom_call.1} parent=5 // pred_check
        _
      $region30: #{tpu_custom_call.1} parent=5 // pred_check_branch
        %144 = sbr.rel (%p141) target = $region32
      $region31: #{tpu_custom_call.1} parent=5 // pred_region
        %s145 = ssub.s32 %s12, 1
        %p146 = scmp.lt.s32.totalorder %s17, 1
        %s147 = scalar_select %p146, %s17, 1
        %s148 = smul.addr %s147, 3
        %s149 = smul.addr %s148, 8
        %s150 = scalar_lea.vmem %s0, %s149
        %p151 = pneg %p38
        %p152 = pneg %p35
        %p153 = pneg %p59
        %p154 = pneg %p56
        %p155 = pneg %p80
        %p156 = pneg %p77
        %p157 = pneg %p106
        %p158 = pneg %p103
        %s159 = sand.u32 %s93, 1
        %s160 = scalar_lea.sflag [#allocation3], %s159
        %s161 = sand.u32 %s93, 1
        %s162 = smul.addr %s161, 48
        %s163 = scalar_lea.vmem [#allocation2], %s162
        %p164 = scmp.lt.s32.totalorder %s17, 1
        %s165 = scalar_select %p164, %s17, 1
        %s166 = smul.addr %s165, 3
        %s167 = smul.addr %s166, 8
        %s168 = scalar_lea.vmem %s0, %s167
        %v170 = vld [vmem:[%s2] sm:$0xf]
        %v171 = vld [vmem:[%s2 + $0x4] sm:$0xf]
        %v172 = vld [vmem:[%s2 + $0x8] sm:$0xf]
        %v173 = vld [vmem:[%s1] sm:$0xf]
        %v174 = vld [vmem:[%s1 + $0x4] sm:$0xf]
        %v175 = vld [vmem:[%s168] sm:$0xff]
        %v176 = vunpack.c.l.u8.bf16 %v175
        %v177 = vunpack.c.h.u8.bf16 %v175
        %v181 = vunpack.c.l.b16 %v170
        %v182 = vunpack.c.l.b16 %v171
        %v183 = vunpack.c.l.b16 %v172
        %v184 = vpack.c.b16 %v182, %v181
        %v185 = vpack.c.b16 %v183, %v183
        %vm187 = vcmask 195584
        %v189 = vsel %vm187, %v176, 0
        %v192 = vsel %vm187, %v177, 0
        %vm194 = vcmask 1043456
        %v196 = vsel %vm194, %v185, 0
        %198 = vmatprep.subr.bf16.mxu0 0
        %199 = vmatpush1.bf16.msra.mxu0 %v184
        %200 = vmatprep.subr.bf16.mxu0 0
        %201 = vmatpush1.bf16.msra.mxu0 %v196
        %202 = vmatprep.subr.bf16.mxu0 0
        %203 = vmatpush1.bf16.msra.mxu0 0
        %204 = vmatprep.subr.bf16.mxu0 0
        %205 = vmatpush1.bf16.msra.mxu0 0
        %206 = vmatprep.subr.bf16.mxu0 0
        %207 = vmatpush1.bf16.msra.mxu0 0
        %208 = vmatprep.subr.bf16.mxu0 0
        %209 = vmatpush1.bf16.msra.mxu0 0
        %210 = vmatprep.subr.bf16.mxu0 0
        %211 = vmatpush1.bf16.msra.mxu0 0
        %212 = vmatprep.subr.bf16.mxu0 0
        %213 = vmatpush1.bf16.msra.mxu0 0
        %214 = vmatprep.subr.bf16.mxu0 0
        %215 = vmatpush1.bf16.msra.mxu0 0
        %216 = vmatprep.subr.bf16.mxu0 0
        %217 = vmatpush1.bf16.msra.mxu0 0
        %218 = vmatprep.subr.bf16.mxu0 0
        %219 = vmatpush1.bf16.msra.mxu0 0
        %220 = vmatprep.subr.bf16.mxu0 0
        %221 = vmatpush1.bf16.msra.mxu0 0
        %222 = vmatprep.subr.bf16.mxu0 0
        %223 = vmatpush1.bf16.msra.mxu0 0
        %224 = vmatprep.subr.bf16.mxu0 0
        %225 = vmatpush1.bf16.msra.mxu0 0
        %226 = vmatprep.subr.bf16.mxu0 0
        %227 = vmatpush1.bf16.msra.mxu0 0
        %228 = vmatprep.subr.bf16.mxu0 0
        %229 = vmatpush1.bf16.msra.mxu0 0
        %230 = vmatprep.mubr.bf16.mxu0 0
        %231 = vmatmul.mubr.bf16.gmra.mrb[0].mxu0 %v189
        %v232 = vpop.f32.mrb[0].mxu0
        %v233 = vadd.f32 0.0, %v232
        %v234 = vpop.f32.mrb[0].mxu0
        %v235 = vpop.f32.mrb[0].mxu0
        %v236 = vadd.f32 0.0, %v235
        %v237 = vpop.f32.mrb[0].mxu0
        %238 = vmatprep.mubr.bf16.mxu0 0
        %239 = vmatmul.mubr.bf16.gmra.mrb[0].mxu0 %v192
        %v240 = vpop.f32.mrb[0].mxu0
        %v241 = vadd.f32 0.0, %v240
        %v242 = vpop.f32.mrb[0].mxu0
        %v243 = vpop.f32.mrb[0].mxu0
        %v244 = vadd.f32 0.0, %v243
        %v245 = vpop.f32.mrb[0].mxu0
        %246 = vdwg.mxu0
        %v247 = vpack.c.bf16 %v236, %v233
        %v248 = vpack.c.bf16 %v244, %v241
        %v251 = vunpack.c.l.b16 %v173
        %v252 = vunpack.c.l.b16 %v174
        %v253 = vpack.c.b16 %v252, %v251
        %vm254 = vcmask 244736
        %v256 = vsel %vm254, %v253, 0
        %vm258 = vcmask 1046528
        %v260 = vsel %vm258, %v248, 0
        %262 = vmatprep.subr.bf16.mxu0 0
        %263 = vmatpush1.bf16.msra.mxu0 %v247
        %264 = vmatprep.subr.bf16.mxu0 0
        %265 = vmatpush1.bf16.msra.mxu0 %v260
        %266 = vmatprep.subr.bf16.mxu0 0
        %267 = vmatpush1.bf16.msra.mxu0 0
        %268 = vmatprep.subr.bf16.mxu0 0
        %269 = vmatpush1.bf16.msra.mxu0 0
        %270 = vmatprep.subr.bf16.mxu0 0
        %271 = vmatpush1.bf16.msra.mxu0 0
        %272 = vmatprep.subr.bf16.mxu0 0
        %273 = vmatpush1.bf16.msra.mxu0 0
        %274 = vmatprep.subr.bf16.mxu0 0
        %275 = vmatpush1.bf16.msra.mxu0 0
        %276 = vmatprep.subr.bf16.mxu0 0
        %277 = vmatpush1.bf16.msra.mxu0 0
        %278 = vmatprep.subr.bf16.mxu0 0
        %279 = vmatpush1.bf16.msra.mxu0 0
        %280 = vmatprep.subr.bf16.mxu0 0
        %281 = vmatpush1.bf16.msra.mxu0 0
        %282 = vmatprep.subr.bf16.mxu0 0
        %283 = vmatpush1.bf16.msra.mxu0 0
        %284 = vmatprep.subr.bf16.mxu0 0
        %285 = vmatpush1.bf16.msra.mxu0 0
        %286 = vmatprep.subr.bf16.mxu0 0
        %287 = vmatpush1.bf16.msra.mxu0 0
        %288 = vmatprep.subr.bf16.mxu0 0
        %289 = vmatpush1.bf16.msra.mxu0 0
        %290 = vmatprep.subr.bf16.mxu0 0
        %291 = vmatpush1.bf16.msra.mxu0 0
        %292 = vmatprep.subr.bf16.mxu0 0
        %293 = vmatpush1.bf16.msra.mxu0 0
        %294 = vmatprep.mubr.bf16.mxu0 0
        %295 = vmatmul.mubr.bf16.gmra.mrb[0].mxu0 %v256
        %v296 = vpop.f32.mrb[0].mxu0
        %v297 = vadd.f32 0.0, %v296
        %v298 = vpop.f32.mrb[0].mxu0
        %v299 = vpop.f32.mrb[0].mxu0
        %v300 = vadd.f32 0.0, %v299
        %v301 = vpop.f32.mrb[0].mxu0
        %302 = vdwg.mxu0
        %v303 = vround.ne.pseudo %v297
        %v304 = vround.ne.pseudo %v300
        %v305 = vmax.f32 %v303, 0.0
        %v306 = vmax.f32 %v304, 0.0
        %v307 = vmin.f32 %v305, 255.0
        %v308 = vmin.f32 %v306, 255.0
        %v309 = vmul.f32 %v307, 0.014598426
        %v310 = vmul.f32 %v308, 0.014598426
        %v311 = vadd.f32 %v309, -1.7922626
        %v312 = vadd.f32 %v310, -1.7922626
        %vm313 = vcmask 130048
        %314 = vst.msk [vmem:[%s163] sm:$0xff] %vm313, %v311
        %315 = vst.msk [vmem:[%s163 + $0x8] sm:$0xff] %vm313, %v312
        %s316 = scalar_lea.vmem %s168, 8
        %v317 = vld [vmem:[%s316] sm:$0xff]
        %v318 = vunpack.c.l.u8.bf16 %v317
        %v319 = vunpack.c.h.u8.bf16 %v317
        %v321 = vsel %vm187, %v318, 0
        %v324 = vsel %vm187, %v319, 0
        %326 = vmatprep.subr.bf16.mxu0 0
        %327 = vmatpush1.bf16.msra.mxu0 %v184
        %328 = vmatprep.subr.bf16.mxu0 0
        %329 = vmatpush1.bf16.msra.mxu0 %v196
        %330 = vmatprep.subr.bf16.mxu0 0
        %331 = vmatpush1.bf16.msra.mxu0 0
        %332 = vmatprep.subr.bf16.mxu0 0
        %333 = vmatpush1.bf16.msra.mxu0 0
        %334 = vmatprep.subr.bf16.mxu0 0
        %335 = vmatpush1.bf16.msra.mxu0 0
        %336 = vmatprep.subr.bf16.mxu0 0
        %337 = vmatpush1.bf16.msra.mxu0 0
        %338 = vmatprep.subr.bf16.mxu0 0
        %339 = vmatpush1.bf16.msra.mxu0 0
        %340 = vmatprep.subr.bf16.mxu0 0
        %341 = vmatpush1.bf16.msra.mxu0 0
        %342 = vmatprep.subr.bf16.mxu0 0
        %343 = vmatpush1.bf16.msra.mxu0 0
        %344 = vmatprep.subr.bf16.mxu0 0
        %345 = vmatpush1.bf16.msra.mxu0 0
        %346 = vmatprep.subr.bf16.mxu0 0
        %347 = vmatpush1.bf16.msra.mxu0 0
        %348 = vmatprep.subr.bf16.mxu0 0
        %349 = vmatpush1.bf16.msra.mxu0 0
        %350 = vmatprep.subr.bf16.mxu0 0
        %351 = vmatpush1.bf16.msra.mxu0 0
        %352 = vmatprep.subr.bf16.mxu0 0
        %353 = vmatpush1.bf16.msra.mxu0 0
        %354 = vmatprep.subr.bf16.mxu0 0
        %355 = vmatpush1.bf16.msra.mxu0 0
        %356 = vmatprep.subr.bf16.mxu0 0
        %357 = vmatpush1.bf16.msra.mxu0 0
        %358 = vmatprep.mubr.bf16.mxu0 0
        %359 = vmatmul.mubr.bf16.gmra.mrb[0].mxu0 %v321
        %v360 = vpop.f32.mrb[0].mxu0
        %v361 = vadd.f32 0.0, %v360
        %v362 = vpop.f32.mrb[0].mxu0
        %v363 = vpop.f32.mrb[0].mxu0
        %v364 = vadd.f32 0.0, %v363
        %v365 = vpop.f32.mrb[0].mxu0
        %366 = vmatprep.mubr.bf16.mxu0 0
        %367 = vmatmul.mubr.bf16.gmra.mrb[0].mxu0 %v324
        %v368 = vpop.f32.mrb[0].mxu0
        %v369 = vadd.f32 0.0, %v368
        %v370 = vpop.f32.mrb[0].mxu0
        %v371 = vpop.f32.mrb[0].mxu0
        %v372 = vadd.f32 0.0, %v371
        %v373 = vpop.f32.mrb[0].mxu0
        %374 = vdwg.mxu0
        %v375 = vpack.c.bf16 %v364, %v361
        %v376 = vpack.c.bf16 %v372, %v369
        %v378 = vsel %vm258, %v376, 0
        %380 = vmatprep.subr.bf16.mxu0 0
        %381 = vmatpush1.bf16.msra.mxu0 %v375
        %382 = vmatprep.subr.bf16.mxu0 0
        %383 = vmatpush1.bf16.msra.mxu0 %v378
        %384 = vmatprep.subr.bf16.mxu0 0
        %385 = vmatpush1.bf16.msra.mxu0 0
        %386 = vmatprep.subr.bf16.mxu0 0
        %387 = vmatpush1.bf16.msra.mxu0 0
        %388 = vmatprep.subr.bf16.mxu0 0
        %389 = vmatpush1.bf16.msra.mxu0 0
        %390 = vmatprep.subr.bf16.mxu0 0
        %391 = vmatpush1.bf16.msra.mxu0 0
        %392 = vmatprep.subr.bf16.mxu0 0
        %393 = vmatpush1.bf16.msra.mxu0 0
        %394 = vmatprep.subr.bf16.mxu0 0
        %395 = vmatpush1.bf16.msra.mxu0 0
        %396 = vmatprep.subr.bf16.mxu0 0
        %397 = vmatpush1.bf16.msra.mxu0 0
        %398 = vmatprep.subr.bf16.mxu0 0
        %399 = vmatpush1.bf16.msra.mxu0 0
        %400 = vmatprep.subr.bf16.mxu0 0
        %401 = vmatpush1.bf16.msra.mxu0 0
        %402 = vmatprep.subr.bf16.mxu0 0
        %403 = vmatpush1.bf16.msra.mxu0 0
        %404 = vmatprep.subr.bf16.mxu0 0
        %405 = vmatpush1.bf16.msra.mxu0 0
        %406 = vmatprep.subr.bf16.mxu0 0
        %407 = vmatpush1.bf16.msra.mxu0 0
        %408 = vmatprep.subr.bf16.mxu0 0
        %409 = vmatpush1.bf16.msra.mxu0 0
        %410 = vmatprep.subr.bf16.mxu0 0
        %411 = vmatpush1.bf16.msra.mxu0 0
        %412 = vmatprep.mubr.bf16.mxu0 0
        %413 = vmatmul.mubr.bf16.gmra.mrb[0].mxu0 %v256
        %v414 = vpop.f32.mrb[0].mxu0
        %v415 = vadd.f32 0.0, %v414
        %v416 = vpop.f32.mrb[0].mxu0
        %v417 = vpop.f32.mrb[0].mxu0
        %v418 = vadd.f32 0.0, %v417
        %v419 = vpop.f32.mrb[0].mxu0
        %420 = vdwg.mxu0
        %v421 = vround.ne.pseudo %v415
        %v422 = vround.ne.pseudo %v418
        %v423 = vmax.f32 %v421, 0.0
        %v424 = vmax.f32 %v422, 0.0
        %v425 = vmin.f32 %v423, 255.0
        %v426 = vmin.f32 %v424, 255.0
        %v427 = vmul.f32 %v425, 0.015007769
        %v428 = vmul.f32 %v426, 0.015007769
        %v429 = vadd.f32 %v427, -1.7520971
        %v430 = vadd.f32 %v428, -1.7520971
        %s431 = scalar_lea.vmem %s163, 16 [#allocation2]
        %432 = vst.msk [vmem:[%s431] sm:$0xff] %vm313, %v429
        %433 = vst.msk [vmem:[%s431 + $0x8] sm:$0xff] %vm313, %v430
        %s434 = scalar_lea.vmem %s168, 16
        %v435 = vld [vmem:[%s434] sm:$0xff]
        %v436 = vunpack.c.l.u8.bf16 %v435
        %v437 = vunpack.c.h.u8.bf16 %v435
        %v439 = vsel %vm187, %v436, 0
        %v442 = vsel %vm187, %v437, 0
        %444 = vmatprep.subr.bf16.mxu0 0
        %445 = vmatpush1.bf16.msra.mxu0 %v184
        %446 = vmatprep.subr.bf16.mxu0 0
        %447 = vmatpush1.bf16.msra.mxu0 %v196
        %448 = vmatprep.subr.bf16.mxu0 0
        %449 = vmatpush1.bf16.msra.mxu0 0
        %450 = vmatprep.subr.bf16.mxu0 0
        %451 = vmatpush1.bf16.msra.mxu0 0
        %452 = vmatprep.subr.bf16.mxu0 0
        %453 = vmatpush1.bf16.msra.mxu0 0
        %454 = vmatprep.subr.bf16.mxu0 0
        %455 = vmatpush1.bf16.msra.mxu0 0
        %456 = vmatprep.subr.bf16.mxu0 0
        %457 = vmatpush1.bf16.msra.mxu0 0
        %458 = vmatprep.subr.bf16.mxu0 0
        %459 = vmatpush1.bf16.msra.mxu0 0
        %460 = vmatprep.subr.bf16.mxu0 0
        %461 = vmatpush1.bf16.msra.mxu0 0
        %462 = vmatprep.subr.bf16.mxu0 0
        %463 = vmatpush1.bf16.msra.mxu0 0
        %464 = vmatprep.subr.bf16.mxu0 0
        %465 = vmatpush1.bf16.msra.mxu0 0
        %466 = vmatprep.subr.bf16.mxu0 0
        %467 = vmatpush1.bf16.msra.mxu0 0
        %468 = vmatprep.subr.bf16.mxu0 0
        %469 = vmatpush1.bf16.msra.mxu0 0
        %470 = vmatprep.subr.bf16.mxu0 0
        %471 = vmatpush1.bf16.msra.mxu0 0
        %472 = vmatprep.subr.bf16.mxu0 0
        %473 = vmatpush1.bf16.msra.mxu0 0
        %474 = vmatprep.subr.bf16.mxu0 0
        %475 = vmatpush1.bf16.msra.mxu0 0
        %476 = vmatprep.mubr.bf16.mxu0 0
        %477 = vmatmul.mubr.bf16.gmra.mrb[0].mxu0 %v439
        %v478 = vpop.f32.mrb[0].mxu0
        %v479 = vadd.f32 0.0, %v478
        %v480 = vpop.f32.mrb[0].mxu0
        %v481 = vpop.f32.mrb[0].mxu0
        %v482 = vadd.f32 0.0, %v481
        %v483 = vpop.f32.mrb[0].mxu0
        %484 = vmatprep.mubr.bf16.mxu0 0
        %485 = vmatmul.mubr.bf16.gmra.mrb[0].mxu0 %v442
        %v486 = vpop.f32.mrb[0].mxu0
        %v487 = vadd.f32 0.0, %v486
        %v488 = vpop.f32.mrb[0].mxu0
        %v489 = vpop.f32.mrb[0].mxu0
        %v490 = vadd.f32 0.0, %v489
        %v491 = vpop.f32.mrb[0].mxu0
        %492 = vdwg.mxu0
        %v493 = vpack.c.bf16 %v482, %v479
        %v494 = vpack.c.bf16 %v490, %v487
        %v496 = vsel %vm258, %v494, 0
        %498 = vmatprep.subr.bf16.mxu0 0
        %499 = vmatpush1.bf16.msra.mxu0 %v493
        %500 = vmatprep.subr.bf16.mxu0 0
        %501 = vmatpush1.bf16.msra.mxu0 %v496
        %502 = vmatprep.subr.bf16.mxu0 0
        %503 = vmatpush1.bf16.msra.mxu0 0
        %504 = vmatprep.subr.bf16.mxu0 0
        %505 = vmatpush1.bf16.msra.mxu0 0
        %506 = vmatprep.subr.bf16.mxu0 0
        %507 = vmatpush1.bf16.msra.mxu0 0
        %508 = vmatprep.subr.bf16.mxu0 0
        %509 = vmatpush1.bf16.msra.mxu0 0
        %510 = vmatprep.subr.bf16.mxu0 0
        %511 = vmatpush1.bf16.msra.mxu0 0
        %512 = vmatprep.subr.bf16.mxu0 0
        %513 = vmatpush1.bf16.msra.mxu0 0
        %514 = vmatprep.subr.bf16.mxu0 0
        %515 = vmatpush1.bf16.msra.mxu0 0
        %516 = vmatprep.subr.bf16.mxu0 0
        %517 = vmatpush1.bf16.msra.mxu0 0
        %518 = vmatprep.subr.bf16.mxu0 0
        %519 = vmatpush1.bf16.msra.mxu0 0
        %520 = vmatprep.subr.bf16.mxu0 0
        %521 = vmatpush1.bf16.msra.mxu0 0
        %522 = vmatprep.subr.bf16.mxu0 0
        %523 = vmatpush1.bf16.msra.mxu0 0
        %524 = vmatprep.subr.bf16.mxu0 0
        %525 = vmatpush1.bf16.msra.mxu0 0
        %526 = vmatprep.subr.bf16.mxu0 0
        %527 = vmatpush1.bf16.msra.mxu0 0
        %528 = vmatprep.subr.bf16.mxu0 0
        %529 = vmatpush1.bf16.msra.mxu0 0
        %530 = vmatprep.mubr.bf16.mxu0 0
        %531 = vmatmul.mubr.bf16.gmra.mrb[0].mxu0 %v256
        %v532 = vpop.f32.mrb[0].mxu0
        %v533 = vadd.f32 0.0, %v532
        %v534 = vpop.f32.mrb[0].mxu0
        %v535 = vpop.f32.mrb[0].mxu0
        %v536 = vadd.f32 0.0, %v535
        %v537 = vpop.f32.mrb[0].mxu0
        %538 = vdwg.mxu0
        %v539 = vround.ne.pseudo %v533
        %v540 = vround.ne.pseudo %v536
        %v541 = vmax.f32 %v539, 0.0
        %v542 = vmax.f32 %v540, 0.0
        %v543 = vmin.f32 %v541, 255.0
        %v544 = vmin.f32 %v542, 255.0
        %v545 = vmul.f32 %v543, 0.014220065
        %v546 = vmul.f32 %v544, 0.014220065
        %v547 = vadd.f32 %v545, -1.4802197
        %v548 = vadd.f32 %v546, -1.4802197
        %s549 = scalar_lea.vmem %s163, 32 [#allocation2]
        %550 = vst.msk [vmem:[%s549] sm:$0xff] %vm313, %v547
        %551 = vst.msk [vmem:[%s549 + $0x8] sm:$0xff] %vm313, %v548
        %s552 = sand.u32 %s93, 1
        %s553 = scalar_lea.sflag [#allocation3], %s552
        %s554 = sand.u32 %s93, 1
        %s555 = smul.addr %s554, 48
        %s556 = scalar_lea.vmem [#allocation2], %s555
        // Predicated region
        $region33: #{tpu_custom_call.1} parent=31 // pred_check
          %p557 = pneg %p103
        $region34: #{tpu_custom_call.1} parent=31 // pred_check_branch
          %559 = sbr.rel (%p557) target = $region36
        $region35: #{tpu_custom_call.1} parent=31 // pred_region
          %s561 = ssub.s32 768, 768
          %562 = vsyncadd %s553, %s561
          %s563 = smul.addr %s17, 6
          %s564 = smul.addr %s563, 128
          %s565 = scalar_lea.hbm %s3, %s564
          %s566 = sshll.u32 %s556, 4
          %s567 = int_to_ptr.vmem [resolvable:$true] %s566
          %572 = dma.vmem_to_hbm [thread:$0]  %s567, 768, %s565, %s553, 128, 128, 8
        $region36: #{tpu_custom_call.1} parent=31 // pred_fallthru
          _
      $region32: #{tpu_custom_call.1} parent=5 // pred_fallthru
        _
      %p573 = scmp.le.s32.totalorder 2, %s12
      // Predicated region
      $region37: #{tpu_custom_call.1} parent=5 // pred_check
        %p574 = pneg %p573
      $region38: #{tpu_custom_call.1} parent=5 // pred_check_branch
        %576 = sbr.rel (%p574) target = $region40
      $region39: #{tpu_custom_call.1} parent=5 // pred_region
        %s577 = ssub.s32 %s12, 2
        // Predicated region
        $region41: #{tpu_custom_call.1} parent=39 // pred_check
          %p578 = pneg %p109
        $region42: #{tpu_custom_call.1} parent=39 // pred_check_branch
          %580 = sbr.rel (%p578) target = $region44
        $region43: #{tpu_custom_call.1} parent=39 // pred_region
          %s581 = sand.u32 %s94, 1
          %s582 = scalar_lea.sflag [#allocation3], %s581
          %s583 = sand.u32 %s94, 1
          %s584 = smul.addr %s583, 48
          %s585 = scalar_lea.vmem [#allocation2], %s584
          %586 = dma.done %s582, 768
        $region44: #{tpu_custom_call.1} parent=39 // pred_fallthru
          _
      $region40: #{tpu_custom_call.1} parent=5 // pred_fallthru
        _
    $region6: #{tpu_custom_call.1} parent=1 // loop_footer
      %s16 = sadd.s32 1, %s12
    $region7: #{tpu_custom_call.1} parent=1 // loop_footer_branch
      %11 = sbr.rel target = $region3
    $region8: #{tpu_custom_call.1} parent=1 // loop_exit
      _
    %587 = vsyncpa [#allocation3], 1
    %s588 = scalar_lea.sflag [#allocation3], 1
    %589 = vsyncpa %s588, 1

</llo_original>
